<compile_context>
chip_gen: v7x
topology: tpu7x:2x2x1
jax: 0.10.0
libtpu: 0.0.40
codegen_flags: <defaults>
</compile_context>

<pallas_src>
import functools

import jax
import jax.numpy as jnp
from jax.experimental import pallas as pl
from jax.experimental.pallas import tpu as pltpu


def _round_up(x, m):
    return ((x + m - 1) // m) * m


def _fc_kernel_single_k(x_ref, w_ref, b_ref, o_ref, *, apply_relu: bool):
    """K fits one block: fused matmul + bias + ReLU, no accumulator scratch."""
    y = jnp.dot(x_ref[...], w_ref[...], preferred_element_type=jnp.float32)
    y = y + b_ref[...]  # bias broadcast over rows
    if apply_relu:
        y = jnp.maximum(y, 0.0)
    o_ref[...] = y.astype(o_ref.dtype)


def _fc_kernel_multi_k(x_ref, w_ref, b_ref, o_ref, acc_ref, *, apply_relu: bool):
    """K tiled: f32 VMEM accumulator with init/finalize gated on the K axis."""
    k = pl.program_id(2)

    @pl.when(k == 0)
    def _():
        acc_ref[...] = jnp.zeros_like(acc_ref)

    acc_ref[...] += jnp.dot(
        x_ref[...], w_ref[...], preferred_element_type=jnp.float32
    )

    @pl.when(k == pl.num_programs(2) - 1)
    def _():
        y = acc_ref[...] + b_ref[...]
        if apply_relu:
            y = jnp.maximum(y, 0.0)
        o_ref[...] = y.astype(o_ref.dtype)


def fc_forward(x, w, b, *, relu=True, tm=None, tn=None, tk=None):
    """y = relu(x @ w + b). x: (M, K), w: (K, N), b: (N,)."""
    M, K = x.shape
    K2, N = w.shape
    assert K == K2 and b.shape == (N,)

    out_dtype = x.dtype
    dt_bytes = jnp.dtype(x.dtype).itemsize
    # Sublane packing: 8 rows/f32, 16 rows/bf16, 32 rows/int8.
    sublane = 8 if dt_bytes == 4 else (16 if dt_bytes == 2 else 32)

    # Tile selection: lane-dense output (tn multiple of 128), sublane-aligned
    # tm, 128-aligned tk; capped so double-buffered tiles fit comfortably in
    # scoped VMEM on every generation (v5e/v6e/v7x).
    tm = tm or min(256, _round_up(M, sublane))
    tn = tn or min(512, _round_up(N, 128))
    tk = tk or min(1024, _round_up(K, 128))
    tm = _round_up(tm, sublane)
    tn = _round_up(tn, 128)
    tk = _round_up(tk, 128)

    # Pad so the tiles divide the problem exactly (zero-padded K columns of x
    # multiply zero-padded rows of W -> contribute nothing; padded M rows and
    # N columns are sliced off at the end).
    Mp, Np, Kp = _round_up(M, tm), _round_up(N, tn), _round_up(K, tk)
    xp = jnp.pad(x, ((0, Mp - M), (0, Kp - K))) if (Mp != M or Kp != K) else x
    wp = jnp.pad(w, ((0, Kp - K), (0, Np - N))) if (Kp != K or Np != N) else w
    bp = jnp.pad(b, (0, Np - N)) if Np != N else b
    b2 = bp.reshape(1, Np)

    grid_m, grid_n, grid_k = Mp // tm, Np // tn, Kp // tk

    # Scoped-VMEM budget: double-buffered x / W / bias / out tiles plus the
    # f32 accumulator, with ~50% headroom; clamped to a sane range.
    tile_bytes = (
        2 * (tm * tk + tk * tn + tn + tm * tn) * dt_bytes + tm * tn * 4
    )
    vmem_limit = int(
        min(max(int(tile_bytes * 1.5), 8 * 1024 * 1024), 100 * 1024 * 1024)
    )

    cost = pl.CostEstimate(
        flops=2 * M * N * K,
        transcendentals=0,
        bytes_accessed=(M * K + K * N + N + M * N) * dt_bytes,
    )

    if grid_k == 1:
        # Fast path: whole (padded) K in one block -> no accumulator scratch.
        kernel = functools.partial(_fc_kernel_single_k, apply_relu=relu)
        out = pl.pallas_call(
            kernel,
            out_shape=jax.ShapeDtypeStruct((Mp, Np), out_dtype),
            grid_spec=pltpu.PrefetchScalarGridSpec(
                num_scalar_prefetch=0,
                grid=(grid_m, grid_n),
                in_specs=[
                    pl.BlockSpec((tm, Kp), lambda i, j: (i, 0)),
                    pl.BlockSpec((Kp, tn), lambda i, j: (0, j)),
                    pl.BlockSpec((1, tn), lambda i, j: (0, j)),
                ],
                out_specs=pl.BlockSpec((tm, tn), lambda i, j: (i, j)),
            ),
            compiler_params=pltpu.CompilerParams(
                dimension_semantics=("parallel", "parallel"),
                vmem_limit_bytes=vmem_limit,
            ),
            cost_estimate=cost,
        )(xp, wp, b2)
    else:
        kernel = functools.partial(_fc_kernel_multi_k, apply_relu=relu)
        out = pl.pallas_call(
            kernel,
            out_shape=jax.ShapeDtypeStruct((Mp, Np), out_dtype),
            grid_spec=pltpu.PrefetchScalarGridSpec(
                num_scalar_prefetch=0,
                grid=(grid_m, grid_n, grid_k),
                in_specs=[
                    pl.BlockSpec((tm, tk), lambda i, j, k: (i, k)),
                    pl.BlockSpec((tk, tn), lambda i, j, k: (k, j)),
                    pl.BlockSpec((1, tn), lambda i, j, k: (0, j)),
                ],
                out_specs=pl.BlockSpec((tm, tn), lambda i, j, k: (i, j)),
                scratch_shapes=[pltpu.VMEM((tm, tn), jnp.float32)],
            ),
            compiler_params=pltpu.CompilerParams(
                dimension_semantics=("parallel", "parallel", "arbitrary"),
                vmem_limit_bytes=vmem_limit,
            ),
            cost_estimate=cost,
        )(xp, wp, b2)

    if Mp != M or Np != N:
        out = out[:M, :N]
    return out


class FCPallas:
    """Mirror of the PyTorch FC module: Linear(in_features, out_features) + ReLU."""

    def __init__(self, in_features, out_features, relu=True, key=None):
        if key is None:
            key = jax.random.PRNGKey(0)
        kw, kb = jax.random.split(key)
        # nn.Linear init: U(-1/sqrt(in), 1/sqrt(in)).
        bound = 1.0 / (in_features ** 0.5)
        # PyTorch weight is (out, in); store transposed (in, out) for x @ W.
        self.w = jax.random.uniform(
            kw, (in_features, out_features), jnp.float32, -bound, bound
        )
        self.b = jax.random.uniform(
            kb, (out_features,), jnp.float32, -bound, bound
        )
        self.relu = relu

    def __call__(self, x, **tile_kwargs):
        return fc_forward(x, self.w, self.b, relu=self.relu, **tile_kwargs)


if __name__ == "__main__":
    key = jax.random.PRNGKey(0)
    kx, kp, kx2, kp2 = jax.random.split(key, 4)

    # --- Case 1: the module's natural small shape (single-K fast path,
    #     N padded 64 -> 128 for lane-dense stores). ---
    batch, in_features, out_features = 8, 32, 64
    x = jax.random.normal(kx, (batch, in_features), jnp.float32)
    fc = FCPallas(in_features, out_features, relu=True, key=kp)
    y = jax.block_until_ready(fc(x))
    y_ref = jnp.maximum(x @ fc.w + fc.b, 0.0)
    assert y.shape == (batch, out_features)
    assert jnp.allclose(y, y_ref, atol=1e-5, rtol=1e-5)

    # --- Case 2: exercise the padded, multi-K accumulator path
    #     (non-divisible K/N, forced small tiles). ---
    batch2, in2, out2 = 8, 300, 200
    x2 = jax.random.normal(kx2, (batch2, in2), jnp.float32)
    fc2 = FCPallas(in2, out2, relu=False, key=kp2)
    y2 = jax.block_until_ready(fc2(x2, tk=128, tn=128))
    y2_ref = x2 @ fc2.w + fc2.b
    assert y2.shape == (batch2, out2)
    assert jnp.allclose(y2, y2_ref, atol=1e-4, rtol=1e-4)

    print("KERNEL_OK")
</pallas_src>

<mosaic_0001>
module attributes {stable_mosaic.version = 11 : i64} {
  func.func @_fc_kernel_single_k(%arg0: i32, %arg1: i32, %arg2: memref<8x128xf32, #tpu.memory_space<vmem>>, %arg3: memref<128x128xf32, #tpu.memory_space<vmem>>, %arg4: memref<1x128xf32, #tpu.memory_space<vmem>>, %arg5: memref<8x128xf32, #tpu.memory_space<vmem>>) attributes {dimension_semantics = [#tpu.dimension_semantics<parallel>, #tpu.dimension_semantics<parallel>], iteration_bounds = array<i64: 1, 1>, scalar_prefetch = 0 : i64, scratch_operands = 0 : i64, tpu.core_type = #tpu.core_type<tc>, window_params = [{transform_indices = @transform_0, window_bounds = array<i64: 8, 128>}, {transform_indices = @transform_1, window_bounds = array<i64: 128, 128>}, {transform_indices = @transform_2, window_bounds = array<i64: 1, 128>}, {transform_indices = @transform_3, window_bounds = array<i64: 8, 128>}]} {
    %c0 = arith.constant 0 : index
    %c0_0 = arith.constant 0 : index
    %0 = vector.load %arg2[%c0, %c0_0] : memref<8x128xf32, #tpu.memory_space<vmem>>, vector<8x128xf32>
    %c0_1 = arith.constant 0 : index
    %c0_2 = arith.constant 0 : index
    %1 = vector.load %arg3[%c0_1, %c0_2] : memref<128x128xf32, #tpu.memory_space<vmem>>, vector<128x128xf32>
    %cst = arith.constant dense<0.000000e+00> : vector<8x128xf32>
    %2 = tpu.matmul %0, %1, %cst {dimension_numbers = #tpu.dot_dimension_numbers<[1], [0], [0], [1], [0, 0, 1, 1], [], []>} : vector<8x128xf32>, vector<128x128xf32>, vector<8x128xf32> -> vector<8x128xf32>
    %c0_3 = arith.constant 0 : index
    %c0_4 = arith.constant 0 : index
    %3 = vector.load %arg4[%c0_3, %c0_4] : memref<1x128xf32, #tpu.memory_space<vmem>>, vector<1x128xf32>
    %4 = vector.broadcast %3 : vector<1x128xf32> to vector<8x128xf32>
    %5 = arith.addf %2, %4 : vector<8x128xf32>
    %cst_5 = arith.constant 0.000000e+00 : f32
    %6 = vector.broadcast %cst_5 : f32 to vector<8x128xf32>
    %7 = arith.maximumf %5, %6 : vector<8x128xf32>
    %c0_6 = arith.constant 0 : index
    %c0_7 = arith.constant 0 : index
    %8 = vector.load %arg5[%c0_6, %c0_7] : memref<8x128xf32, #tpu.memory_space<vmem>>, vector<8x128xf32>
    tpu.vector_store %arg5[%c0_6, %c0_7], %7 {strides = array<i32>} : memref<8x128xf32, #tpu.memory_space<vmem>>, vector<8x128xf32>,
    return
  }
  func.func @transform_0(%arg0: i32, %arg1: i32) -> (i32, i32) {
    %c0_i32 = arith.constant 0 : i32
    %c0_i32_0 = arith.constant 0 : i32
    return %arg0, %c0_i32 : i32, i32
  }
  func.func @transform_1(%arg0: i32, %arg1: i32) -> (i32, i32) {
    %c0_i32 = arith.constant 0 : i32
    %c0_i32_0 = arith.constant 0 : i32
    return %c0_i32, %arg1 : i32, i32
  }
  func.func @transform_2(%arg0: i32, %arg1: i32) -> (i32, i32) {
    %c0_i32 = arith.constant 0 : i32
    %c0_i32_0 = arith.constant 0 : i32
    return %c0_i32, %arg1 : i32, i32
  }
  func.func @transform_3(%arg0: i32, %arg1: i32) -> (i32, i32) {
    %c0_i32 = arith.constant 0 : i32
    return %arg0, %arg1 : i32, i32
  }
}

</mosaic_0001>

<llo_original>
// kernel: tpu_custom_call.1
$region0: #{tpu_custom_call.1}
  #allocation0 [shape = 'u32[]', space=smem, size = 0x4, offset = 0x4, fixed_abs, tag = 'smem constant byte address 0x4 - core index']
  #allocation1 [shape = 'u32[144,128]{1,0:T(1,128)}', space=vmem, size = 0x12000, scoped, tag = 'internal scratch']
  %s0 = inlined_call_operand.hbm [shape: f32[8,128], index: 0, kind: input, shape index: {}]
  %s1 = inlined_call_operand.hbm [shape: f32[128,128], index: 1, kind: input, shape index: {}]
  %s2 = inlined_call_operand.vmem [shape: f32[1,128], index: 2, kind: input, shape index: {}]
  %s3 = inlined_call_operand.hbm [shape: f32[8,128], index: 3, kind: output, shape index: {}]
  %s4 = sld [smem:[#allocation0]]
  $region30: #{tpu_custom_call.1} parent=0
    _
  %s6 = ssub.s32 1, %s4
  %s7 = scalar_select 0, %s6, %s4
  $region1: #{tpu_custom_call.1} parent=0
    #allocation2 [shape = 'u8[4096]{0}', space=vmem, size = 0x1000, scoped, tag = 'input window, operand 0, single buffered']
    #allocation3 [shape = 's32[1]{0}', space=sflag, size = 0x4, scoped, tag = 'scoped memory for tpu_custom_call.1']
    #allocation4 [shape = 's32[1]{0}', space=sflag, size = 0x4, scoped, tag = 'scoped memory for tpu_custom_call.1']
    #allocation5 [shape = 'u8[65536]{0}', space=vmem, size = 0x10000, scoped, tag = 'input window, operand 1, single buffered']
    #allocation6 [shape = 's32[1]{0}', space=sflag, size = 0x4, scoped, tag = 'scoped memory for tpu_custom_call.1']
    #allocation7 [shape = 'u8[4096]{0}', space=vmem, size = 0x1000, scoped, tag = 'output window, operand 0, single buffered']
    %8 = vsyncpa [#allocation3], 0
    %9 = vsyncpa [#allocation6], 0
    %10 = vsyncpa [#allocation4], 0
    // Predicated region
    $region2: #{tpu_custom_call.1} parent=1 // pred_check
      _
    $region3: #{tpu_custom_call.1} parent=1 // pred_check_branch
      %12 = sbr.rel (0) target = $region5
    $region4: #{tpu_custom_call.1} parent=1 // pred_region
      %s14 = ssub.s32 128, 128
      %15 = vsyncadd [#allocation3], %s14
      %s17 = sshll.u32 [#allocation2], 4
      %s18 = int_to_ptr.vmem [resolvable:$true] %s17
      %20 = dma.hbm_to_vmem [thread:$0]  %s0, 128, %s18, [#allocation3]
    $region5: #{tpu_custom_call.1} parent=1 // pred_fallthru
      _
    // Predicated region
    $region6: #{tpu_custom_call.1} parent=1 // pred_check
      _
    $region7: #{tpu_custom_call.1} parent=1 // pred_check_branch
      %22 = sbr.rel (0) target = $region9
    $region8: #{tpu_custom_call.1} parent=1 // pred_region
      %s24 = ssub.s32 2048, 2048
      %25 = vsyncadd [#allocation6], %s24
      %s26 = sshll.u32 [#allocation5], 4
      %s27 = int_to_ptr.vmem [resolvable:$true] %s26
      %32 = dma.hbm_to_vmem [thread:$0]  %s1, 2048, %s27, [#allocation6], 128, 128, 8
    $region9: #{tpu_custom_call.1} parent=1 // pred_fallthru
      _
    // Predicated region
    $region10: #{tpu_custom_call.1} parent=1 // pred_check
      _
    $region11: #{tpu_custom_call.1} parent=1 // pred_check_branch
      %34 = sbr.rel (0) target = $region13
    $region12: #{tpu_custom_call.1} parent=1 // pred_region
      _
    $region13: #{tpu_custom_call.1} parent=1 // pred_fallthru
      _
    // Predicated region
    $region14: #{tpu_custom_call.1} parent=1 // pred_check
      _
    $region15: #{tpu_custom_call.1} parent=1 // pred_check_branch
      %36 = sbr.rel (0) target = $region17
    $region16: #{tpu_custom_call.1} parent=1 // pred_region
      %37 = dma.done [#allocation3], 128
    $region17: #{tpu_custom_call.1} parent=1 // pred_fallthru
      _
    // Predicated region
    $region18: #{tpu_custom_call.1} parent=1 // pred_check
      _
    $region19: #{tpu_custom_call.1} parent=1 // pred_check_branch
      %39 = sbr.rel (0) target = $region21
    $region20: #{tpu_custom_call.1} parent=1 // pred_region
      %40 = dma.done [#allocation6], 2048
    $region21: #{tpu_custom_call.1} parent=1 // pred_fallthru
      _
    %v41 = vld [vmem:[#allocation2] sm:$0xff]
    %v42 = vld [vmem:[#allocation5] sm:$0xff]
    %v43 = vld [vmem:[#allocation5 + $0x8] sm:$0xff]
    %v44 = vld [vmem:[#allocation5 + $0x10] sm:$0xff]
    %v45 = vld [vmem:[#allocation5 + $0x18] sm:$0xff]
    %v46 = vld [vmem:[#allocation5 + $0x20] sm:$0xff]
    %v47 = vld [vmem:[#allocation5 + $0x28] sm:$0xff]
    %v48 = vld [vmem:[#allocation5 + $0x30] sm:$0xff]
    %v49 = vld [vmem:[#allocation5 + $0x38] sm:$0xff]
    %v50 = vld [vmem:[#allocation5 + $0x40] sm:$0xff]
    %v51 = vld [vmem:[#allocation5 + $0x48] sm:$0xff]
    %v52 = vld [vmem:[#allocation5 + $0x50] sm:$0xff]
    %v53 = vld [vmem:[#allocation5 + $0x58] sm:$0xff]
    %v54 = vld [vmem:[#allocation5 + $0x60] sm:$0xff]
    %v55 = vld [vmem:[#allocation5 + $0x68] sm:$0xff]
    %v56 = vld [vmem:[#allocation5 + $0x70] sm:$0xff]
    %v57 = vld [vmem:[#allocation5 + $0x78] sm:$0xff]
    %v58 = vld [vmem:[%s2] sm:$0x1]
    %v60 = vlaneseq
    %v61 = vshrl.u32 %v60, 7
    %v62 = vsub.s32 0, %v61
    %v63 = vrot.slane %v58, %v62
    %65 = vmatprep.subr.mxu0 0.0
    %66 = vmatpush1.msra.mxu0 %v42
    %67 = vmatprep.subr.mxu0 0.0
    %68 = vmatpush1.msra.mxu0 %v43
    %69 = vmatprep.subr.mxu0 0.0
    %70 = vmatpush1.msra.mxu0 %v44
    %71 = vmatprep.subr.mxu0 0.0
    %72 = vmatpush1.msra.mxu0 %v45
    %73 = vmatprep.subr.mxu0 0.0
    %74 = vmatpush1.msra.mxu0 %v46
    %75 = vmatprep.subr.mxu0 0.0
    %76 = vmatpush1.msra.mxu0 %v47
    %77 = vmatprep.subr.mxu0 0.0
    %78 = vmatpush1.msra.mxu0 %v48
    %79 = vmatprep.subr.mxu0 0.0
    %80 = vmatpush1.msra.mxu0 %v49
    %81 = vmatprep.subr.mxu0 0.0
    %82 = vmatpush1.msra.mxu0 %v50
    %83 = vmatprep.subr.mxu0 0.0
    %84 = vmatpush1.msra.mxu0 %v51
    %85 = vmatprep.subr.mxu0 0.0
    %86 = vmatpush1.msra.mxu0 %v52
    %87 = vmatprep.subr.mxu0 0.0
    %88 = vmatpush1.msra.mxu0 %v53
    %89 = vmatprep.subr.mxu0 0.0
    %90 = vmatpush1.msra.mxu0 %v54
    %91 = vmatprep.subr.mxu0 0.0
    %92 = vmatpush1.msra.mxu0 %v55
    %93 = vmatprep.subr.mxu0 0.0
    %94 = vmatpush1.msra.mxu0 %v56
    %95 = vmatprep.subr.mxu0 0.0
    %96 = vmatpush1.msra.mxu0 %v57
    %97 = vmatprep.subr.mxu0 0.0
    %98 = vmatpush1.msra.mxu0 0.0
    %99 = vmatprep.subr.mxu0 0.0
    %100 = vmatpush1.msra.mxu0 0.0
    %101 = vmatprep.subr.mxu0 0.0
    %102 = vmatpush1.msra.mxu0 0.0
    %103 = vmatprep.subr.mxu0 0.0
    %104 = vmatpush1.msra.mxu0 0.0
    %105 = vmatprep.subr.mxu0 0.0
    %106 = vmatpush1.msra.mxu0 0.0
    %107 = vmatprep.subr.mxu0 0.0
    %108 = vmatpush1.msra.mxu0 0.0
    %109 = vmatprep.subr.mxu0 0.0
    %110 = vmatpush1.msra.mxu0 0.0
    %111 = vmatprep.subr.mxu0 0.0
    %112 = vmatpush1.msra.mxu0 0.0
    %113 = vmatprep.subr.mxu0 0.0
    %114 = vmatpush1.msra.mxu0 0.0
    %115 = vmatprep.subr.mxu0 0.0
    %116 = vmatpush1.msra.mxu0 0.0
    %117 = vmatprep.subr.mxu0 0.0
    %118 = vmatpush1.msra.mxu0 0.0
    %119 = vmatprep.subr.mxu0 0.0
    %120 = vmatpush1.msra.mxu0 0.0
    %121 = vmatprep.subr.mxu0 0.0
    %122 = vmatpush1.msra.mxu0 0.0
    %123 = vmatprep.subr.mxu0 0.0
    %124 = vmatpush1.msra.mxu0 0.0
    %125 = vmatprep.subr.mxu0 0.0
    %126 = vmatpush1.msra.mxu0 0.0
    %127 = vmatprep.subr.mxu0 0.0
    %128 = vmatpush1.msra.mxu0 0.0
    %129 = vmatprep.mubr.f32.mxu0 0.0
    %130 = vmatmul.mubr.f32.gmra.mrb[0].mxu0 %v41
    %v131 = vpop.f32.mrb[0].mxu0
    %v132 = vadd.f32 %v63, %v131
    %v133 = vpop.f32.mrb[0].mxu0
    %134 = vdwg.mxu0
    %v135 = vmax.f32 %v132, 0.0
    %136 = vst [vmem:[#allocation7] sm:$0xff] %v135
    // Predicated region
    $region22: #{tpu_custom_call.1} parent=1 // pred_check
      _
    $region23: #{tpu_custom_call.1} parent=1 // pred_check_branch
      %138 = sbr.rel (0) target = $region25
    $region24: #{tpu_custom_call.1} parent=1 // pred_region
      %s140 = ssub.s32 128, 128
      %141 = vsyncadd [#allocation4], %s140
      %s143 = sshll.u32 [#allocation7], 4
      %s144 = int_to_ptr.vmem [resolvable:$true] %s143
      %146 = dma.vmem_to_hbm [thread:$0]  %s144, 128, %s3, [#allocation4]
    $region25: #{tpu_custom_call.1} parent=1 // pred_fallthru
      _
    // Predicated region
    $region26: #{tpu_custom_call.1} parent=1 // pred_check
      _
    $region27: #{tpu_custom_call.1} parent=1 // pred_check_branch
      %148 = sbr.rel (0) target = $region29
    $region28: #{tpu_custom_call.1} parent=1 // pred_region
      %149 = dma.done [#allocation4], 128
    $region29: #{tpu_custom_call.1} parent=1 // pred_fallthru
      _
    %150 = vsyncpa [#allocation3], 1
    %151 = vsyncpa [#allocation6], 1
    %152 = vsyncpa [#allocation4], 1

</llo_original>
